<compile_context>
chip_gen: v7x
topology: tpu7x:2x2x1
jax: 0.10.0
libtpu: 0.0.40
codegen_flags: <defaults>
</compile_context>

<pallas_src>
from functools import partial

import numpy as np
import jax
import jax.numpy as jnp
from jax.experimental import pallas as pl
from jax.experimental.pallas import tpu as pltpu


def _identity_kernel(x_ref, o_ref):
    # Abstract forward -> pass-through of the resident tile.
    o_ref[...] = x_ref[...]


def _sublane_multiple(dtype):
    """Sublane-alignment requirement per dtype (sub-32-bit packs along sublanes)."""
    itemsize = jnp.dtype(dtype).itemsize
    packing = max(1, 4 // itemsize)  # f32 -> 1, bf16 -> 2, int8/fp8 -> 4
    return 8 * packing


def _lane_dense_shape(total, dtype):
    """Pick (rows, lanes) with lanes a multiple of 128 (unmasked full-lane vst).

    Prefer a factorization whose row count is also sublane-aligned for the
    dtype so every tile is a clean (sublane, lane) multiple.
    """
    sub = _sublane_multiple(dtype)
    candidates = [l for l in (1024, 512, 256, 128) if total % l == 0]
    if not candidates:
        return None
    for lanes in candidates:
        if (total // lanes) % sub == 0:
            return total // lanes, lanes
    lanes = candidates[0]
    return total // lanes, lanes


def _row_block(rows, lanes, dtype, max_tile_bytes=8 * 1024 * 1024):
    """Largest row block that divides `rows`, is sublane-aligned for the dtype,
    keeps one tile <= ~8 MiB (2x in + 2x out double buffers = 32 MiB, inside
    the 48 MiB scoped limit on every generation incl. v7x), and — when
    possible — leaves a grid of >= 2 steps so the "parallel" axis actually
    shards across both TensorCores on v7x."""
    itemsize = jnp.dtype(dtype).itemsize
    sub = _sublane_multiple(dtype)
    cap = max(sub, max_tile_bytes // (lanes * itemsize))
    cap = min(cap, rows)
    best = None
    for cand in range(cap, 0, -1):
        if rows % cand != 0:
            continue
        aligned = (cand % sub == 0) or (cand == rows)
        if not aligned:
            continue
        if rows // cand >= 2:          # prefer a multi-step grid
            return cand
        if best is None:
            best = cand
    return best if best is not None else rows


def _identity_pallas_2d(x2d, row_blk):
    rows, lanes = x2d.shape
    return pl.pallas_call(
        _identity_kernel,
        out_shape=jax.ShapeDtypeStruct(x2d.shape, x2d.dtype),
        grid=(rows // row_blk,),
        in_specs=[pl.BlockSpec((row_blk, lanes), lambda i: (i, 0))],
        out_specs=pl.BlockSpec((row_blk, lanes), lambda i: (i, 0)),
        # Identity is pure HBM traffic: alias input -> output (effective only
        # because the wrapper donates its argument; without donation XLA would
        # insert a defensive full copy).
        input_output_aliases={0: 0},
        compiler_params=pltpu.CompilerParams(
            dimension_semantics=("parallel",),   # megacore / v7x 2-TC sharding
            vmem_limit_bytes=48 * 1024 * 1024,   # headroom below v7x's 64 MiB physical
        ),
    )(x2d)


def _pallas_identity(x):
    orig_shape = x.shape
    dtype = x.dtype
    total = x.size
    if total == 0:
        return x

    dense = _lane_dense_shape(total, dtype)
    if dense is not None:
        rows, lanes = dense
        x2d = x.reshape(rows, lanes)
        out2d = _identity_pallas_2d(x2d, _row_block(rows, lanes, dtype))
        return out2d.reshape(orig_shape)

    # Fallback for sizes not divisible by 128: flatten, pad to a multiple of
    # 128 lanes, reuse the same lane-dense tiled path, then slice the pad off.
    flat = x.reshape(-1)
    padded_total = ((total + 127) // 128) * 128
    flat = jnp.pad(flat, (0, padded_total - total))
    rows, lanes = _lane_dense_shape(padded_total, dtype)
    x2d = flat.reshape(rows, lanes)
    out2d = _identity_pallas_2d(x2d, _row_block(rows, lanes, dtype))
    return out2d.reshape(-1)[:total].reshape(orig_shape)


@partial(jax.jit, donate_argnums=0)
def base_model_forward(x):
    """Stand-in for BaseModel.forward (abstract in PyTorch).

    NOTE: the argument is DONATED — callers must not reuse `x` afterwards.
    Returns the input unchanged via a lane-dense, row-tiled, input/output-
    aliased Pallas TPU pass-through kernel.  (The fastest possible version of
    an abstract forward is simply `return x`; the kernel is kept as the
    scaffold for a future concrete UNet2D forward.)
    """
    return _pallas_identity(x)


def base_model_num_trainable_params():
    """Mirror of BaseModel.summary() / __str__ param count: no parameters."""
    param_shapes = []  # BaseModel.__init__ registers no parameters.
    return int(sum(int(np.prod(s)) for s in param_shapes))


if __name__ == "__main__":
    key = jax.random.PRNGKey(0)
    x = jax.random.normal(key, (2, 4, 16, 16), dtype=jnp.float32)  # NCHW

    # x is donated to base_model_forward: keep a host copy for the check.
    x_host = np.asarray(x)

    y = base_model_forward(x)
    jax.block_until_ready(y)

    assert y.shape == x_host.shape and y.dtype == x_host.dtype
    assert np.allclose(np.asarray(y), x_host)
    assert base_model_num_trainable_params() == 0

    print("KERNEL_OK")
</pallas_src>

<mosaic_0001>
module attributes {stable_mosaic.version = 11 : i64} {
  func.func @_identity_kernel(%arg0: i32, %arg1: memref<8x256xf32, #tpu.memory_space<vmem>>, %arg2: memref<8x256xf32, #tpu.memory_space<vmem>>) attributes {dimension_semantics = [#tpu.dimension_semantics<parallel>], iteration_bounds = array<i64: 1>, scalar_prefetch = 0 : i64, scratch_operands = 0 : i64, tpu.core_type = #tpu.core_type<tc>, window_params = [{transform_indices = @transform_0, window_bounds = array<i64: 8, 256>}, {transform_indices = @transform_1, window_bounds = array<i64: 8, 256>}]} {
    %c0 = arith.constant 0 : index
    %c0_0 = arith.constant 0 : index
    %0 = vector.load %arg1[%c0, %c0_0] : memref<8x256xf32, #tpu.memory_space<vmem>>, vector<8x256xf32>
    %c0_1 = arith.constant 0 : index
    %c0_2 = arith.constant 0 : index
    %1 = vector.load %arg2[%c0_1, %c0_2] : memref<8x256xf32, #tpu.memory_space<vmem>>, vector<8x256xf32>
    tpu.vector_store %arg2[%c0_1, %c0_2], %0 {strides = array<i32>} : memref<8x256xf32, #tpu.memory_space<vmem>>, vector<8x256xf32>,
    return
  }
  func.func @transform_0(%arg0: i32) -> (i32, i32) {
    %c0_i32 = arith.constant 0 : i32
    %c0_i32_0 = arith.constant 0 : i32
    return %arg0, %c0_i32 : i32, i32
  }
  func.func @transform_1(%arg0: i32) -> (i32, i32) {
    %c0_i32 = arith.constant 0 : i32
    %c0_i32_0 = arith.constant 0 : i32
    return %arg0, %c0_i32 : i32, i32
  }
}

</mosaic_0001>

<llo_original>
// kernel: base_model_forward.1
$region0: #{base_model_forward.1}
  #allocation0 [shape = 'u32[]', space=smem, size = 0x4, offset = 0x4, fixed_abs, tag = 'smem constant byte address 0x4 - core index']
  #allocation1 [shape = 'u32[144,128]{1,0:T(1,128)}', space=vmem, size = 0x12000, scoped, tag = 'internal scratch']
  %s0 = inlined_call_operand.vmem [shape: f32[8,256], index: 0, kind: input, shape index: {}, may-alias: {0,1}]
  %s1 = inlined_call_operand.vmem [shape: f32[8,256], index: 1, kind: output, shape index: {}, may-alias: {0,1}]
  %s2 = sld [smem:[#allocation0]]
  $region14: #{base_model_forward.1} parent=0
    _
  %s4 = ssub.s32 1, %s2
  %s5 = scalar_select 0, %s4, %s2
  // Predicated region
  $region2: #{base_model_forward.1} parent=0 // pred_check
    _
  $region3: #{base_model_forward.1} parent=0 // pred_check_branch
    %7 = sbr.rel (0) target = $region5
  $region4: #{base_model_forward.1} parent=0 // pred_region
    _
  $region5: #{base_model_forward.1} parent=0 // pred_fallthru
    _
  %v8 = vld [vmem:[%s0] sm:$0xff]
  %v9 = vld [vmem:[%s0 + $0x8] sm:$0xff]
  %10 = vst [vmem:[%s1] sm:$0xff] %v8
  %11 = vst [vmem:[%s1 + $0x8] sm:$0xff] %v9
  // Predicated region
  $region6: #{base_model_forward.1} parent=0 // pred_check
    _
  $region7: #{base_model_forward.1} parent=0 // pred_check_branch
    %13 = sbr.rel (0) target = $region9
  $region8: #{base_model_forward.1} parent=0 // pred_region
    _
  $region9: #{base_model_forward.1} parent=0 // pred_fallthru
    _
  // Predicated region
  $region10: #{base_model_forward.1} parent=0 // pred_check
    _
  $region11: #{base_model_forward.1} parent=0 // pred_check_branch
    %15 = sbr.rel (0) target = $region13
  $region12: #{base_model_forward.1} parent=0 // pred_region
    _
  $region13: #{base_model_forward.1} parent=0 // pred_fallthru
    _

</llo_original>
